<compile_context>
chip_gen: v6e
topology: v6e:2x2x1
jax: 0.10.0
libtpu: 0.0.40
codegen_flags: <defaults>
</compile_context>

<pallas_src>
import jax
import jax.numpy as jnp
from jax.experimental import pallas as pl
from jax.experimental.pallas import tpu as pltpu

INPUT_DIM = 20
HIDDEN_DIM = 512
IMBALANCE_FACTOR = 10.0


def _mlp_kernel(x_ref, w1_ref, w2_ref, o_ref):
    # fc1 as an NT matmul: contract the feature axis of W1 [H, D] with the
    # feature axis of the natural-layout x tile [TB, D] -> hT [H, TB]; the
    # batch lands on the lane axis without any wrapper-side transpose of x.
    hT = jax.lax.dot_general(
        w1_ref[...], x_ref[...],
        dimension_numbers=(((1,), (1,)), ((), ())),
        preferred_element_type=jnp.float32)
    hT = jnp.maximum(hT, 0.0)                               # ReLU (VPU)
    # Store/reload the 512 x TB intermediate at W2's dtype (bf16 by default):
    # halves the hT VMEM round-trip and halves fc2 MXU work; f32 accumulation.
    hT = hT.astype(w2_ref.dtype)
    # fc2: [1, H] @ [H, TB] -> lane-dense [1, TB] output row (unmasked stores).
    o_ref[...] = jnp.dot(w2_ref[...], hT,
                         preferred_element_type=jnp.float32).astype(o_ref.dtype)


def nn_toy_imbalanced_forward(x, w1, w2, *, block_b=4096,
                              fc1_bf16=False, fc2_bf16=True):
    """y = ReLU(x @ W1.T) @ W2.T.

    x : [B, D_in] f32, w1: [H, D_in] f32, w2: [1, H] f32  ->  y: [B, 1] f32.

    block_b : max batch tile on the lane axis (multiple of 128).
    fc1_bf16: cast x / W1 to bf16 for fc1 (MXU fast path; W1 is scaled by 10,
              so this loosens accuracy).  f32 accumulation either way.
    fc2_bf16: cast the ReLU'd hT and W2 to bf16 for fc2 (default on).
    """
    B, d_in = x.shape
    H, d_in2 = w1.shape
    assert d_in2 == d_in and w2.shape == (1, H)
    assert block_b % 128 == 0, "block_b must be a multiple of 128"

    fc1_dtype = jnp.bfloat16 if fc1_bf16 else jnp.float32
    fc2_dtype = jnp.bfloat16 if fc2_bf16 else jnp.float32
    x_in = x.astype(fc1_dtype)
    w1_in = w1.astype(fc1_dtype)
    w2_in = w2.astype(fc2_dtype)

    # Batch tile: biggest that fits, but give mid/large batches >= 2 grid steps
    # so the "parallel" grid can be sharded across both v7x TensorCores.
    if B <= block_b:
        if B >= 256:
            tb = ((pl.cdiv(B, 2) + 127) // 128) * 128
        else:
            tb = B                      # single full-extent block
    else:
        tb = block_b
    grid = (pl.cdiv(B, tb),)
    # NOTE: the ragged last tile reads undefined columns; this is safe only
    # because each output column depends solely on its own input column and
    # out-of-bounds output writes are dropped by Pallas.

    yT = pl.pallas_call(
        _mlp_kernel,
        out_shape=jax.ShapeDtypeStruct((1, B), jnp.float32),
        grid_spec=pltpu.PrefetchScalarGridSpec(
            num_scalar_prefetch=0,
            grid=grid,
            in_specs=[
                pl.BlockSpec((tb, d_in), lambda i: (i, 0)),   # natural x tiles
                pl.BlockSpec((H, d_in), lambda i: (0, 0)),    # W1 resident across tiles
                pl.BlockSpec((1, H), lambda i: (0, 0)),       # W2 native lane-dense row
            ],
            out_specs=pl.BlockSpec((1, tb), lambda i: (0, i)),  # lane-dense output row
        ),
        compiler_params=pltpu.CompilerParams(
            dimension_semantics=("parallel",),                 # independent batch tiles
            vmem_limit_bytes=48 * 1024 * 1024,                 # above v5e/v7x scoped defaults
        ),
    )(x_in, w1_in, w2_in)

    return yT.reshape(B, 1)


def init_params(key, input_dim=INPUT_DIM, hidden_dim=HIDDEN_DIM,
                imbalance_factor=IMBALANCE_FACTOR):
    """Deterministic xavier_normal init matching the PyTorch __init__."""
    k1, k2 = jax.random.split(key)
    std1 = (2.0 / (input_dim + hidden_dim)) ** 0.5
    std2 = (2.0 / (hidden_dim + 1)) ** 0.5
    w1 = jax.random.normal(k1, (hidden_dim, input_dim), jnp.float32) * std1
    w1 = w1 * imbalance_factor
    w2 = jax.random.normal(k2, (1, hidden_dim), jnp.float32) * std2
    w1_norm = float(jnp.linalg.norm(w1))
    w2_norm = float(jnp.linalg.norm(w2))
    print(f'Initial weight norm ratio ||W1||/||W2|| = {w1_norm / w2_norm:.4f}')
    return w1, w2


def _reference(x, w1, w2):
    hi = jax.lax.Precision.HIGHEST
    h = jnp.maximum(
        jax.lax.dot_general(x, w1, (((1,), (1,)), ((), ())), precision=hi), 0.0)
    return jax.lax.dot_general(h, w2, (((1,), (1,)), ((), ())), precision=hi)


if __name__ == "__main__":
    key = jax.random.PRNGKey(0)
    k_param, k_x = jax.random.split(key)

    w1, w2 = init_params(k_param)                 # W1: [512, 20], W2: [1, 512]

    # 1) Small batch, all-f32 path (single full-extent block), tight check.
    B = 8
    x = jax.random.normal(k_x, (B, INPUT_DIM), jnp.float32)
    y = jax.block_until_ready(
        nn_toy_imbalanced_forward(x, w1, w2, fc1_bf16=False, fc2_bf16=False))
    y_ref = _reference(x, w1, w2)
    assert y.shape == (B, 1)
    assert jnp.allclose(y, y_ref, atol=5e-3, rtol=5e-3)

    # 2) Mid batch, default settings (bf16 fc2, f32 fc1): 2 parallel tiles with
    #    a ragged tail (tb=256, grid=2).
    B2 = 400
    x2 = jax.random.normal(jax.random.PRNGKey(1), (B2, INPUT_DIM), jnp.float32)
    y2 = jax.block_until_ready(nn_toy_imbalanced_forward(x2, w1, w2))
    y2_ref = _reference(x2, w1, w2)
    assert y2.shape == (B2, 1)
    assert jnp.allclose(y2, y2_ref, atol=3e-1, rtol=3e-2)

    # 3) Multi-tile grid path (B > block_b) with ragged tail, full bf16 fast
    #    path; looser tolerance because W1 is scaled by imbalance_factor=10.
    B3 = 1000
    x3 = jax.random.normal(jax.random.PRNGKey(2), (B3, INPUT_DIM), jnp.float32)
    y3 = jax.block_until_ready(
        nn_toy_imbalanced_forward(x3, w1, w2, block_b=512,
                                  fc1_bf16=True, fc2_bf16=True))
    y3_ref = _reference(x3, w1, w2)
    assert y3.shape == (B3, 1)
    assert jnp.allclose(y3, y3_ref, atol=5e-1, rtol=5e-2)

    print("KERNEL_OK")
</pallas_src>

<mosaic_0001>
module attributes {stable_mosaic.version = 11 : i64} {
  func.func @_mlp_kernel(%arg0: i32, %arg1: memref<8x20xf32, #tpu.memory_space<vmem>>, %arg2: memref<512x20xf32, #tpu.memory_space<vmem>>, %arg3: memref<1x512xf32, #tpu.memory_space<vmem>>, %arg4: memref<1x8xf32, #tpu.memory_space<vmem>>) attributes {dimension_semantics = [#tpu.dimension_semantics<parallel>], iteration_bounds = array<i64: 1>, scalar_prefetch = 0 : i64, scratch_operands = 0 : i64, tpu.core_type = #tpu.core_type<tc>, window_params = [{transform_indices = @transform_0, window_bounds = array<i64: 8, 20>}, {pipeline_mode = #tpu.pipeline_mode<synchronous>, transform_indices = @transform_1, window_bounds = array<i64: 512, 20>}, {pipeline_mode = #tpu.pipeline_mode<synchronous>, transform_indices = @transform_2, window_bounds = array<i64: 1, 512>}, {transform_indices = @transform_3, window_bounds = array<i64: 1, 8>}]} {
    %c0 = arith.constant 0 : index
    %c0_0 = arith.constant 0 : index
    %0 = vector.load %arg2[%c0, %c0_0] : memref<512x20xf32, #tpu.memory_space<vmem>>, vector<512x20xf32>
    %c0_1 = arith.constant 0 : index
    %c0_2 = arith.constant 0 : index
    %1 = vector.load %arg1[%c0_1, %c0_2] : memref<8x20xf32, #tpu.memory_space<vmem>>, vector<8x20xf32>
    %cst = arith.constant dense<0.000000e+00> : vector<512x8xf32>
    %2 = tpu.matmul %0, %1, %cst {dimension_numbers = #tpu.dot_dimension_numbers<[1], [1], [0], [0], [0, 0, 1, 0], [], []>} : vector<512x20xf32>, vector<8x20xf32>, vector<512x8xf32> -> vector<512x8xf32>
    %cst_3 = arith.constant 0.000000e+00 : f32
    %3 = vector.broadcast %cst_3 : f32 to vector<512x8xf32>
    %4 = arith.maximumf %2, %3 : vector<512x8xf32>
    %c0_4 = arith.constant 0 : index
    %c0_5 = arith.constant 0 : index
    %5 = vector.load %arg3[%c0_4, %c0_5] : memref<1x512xf32, #tpu.memory_space<vmem>>, vector<1x512xf32>
    %cst_6 = arith.constant dense<0.000000e+00> : vector<1x8xf32>
    %6 = tpu.matmul %5, %4, %cst_6 {dimension_numbers = #tpu.dot_dimension_numbers<[1], [0], [0], [1], [0, 0, 1, 1], [], []>} : vector<1x512xf32>, vector<512x8xf32>, vector<1x8xf32> -> vector<1x8xf32>
    %c0_7 = arith.constant 0 : index
    %c0_8 = arith.constant 0 : index
    %7 = vector.load %arg4[%c0_7, %c0_8] : memref<1x8xf32, #tpu.memory_space<vmem>>, vector<1x8xf32>
    tpu.vector_store %arg4[%c0_7, %c0_8], %6 {strides = array<i32>} : memref<1x8xf32, #tpu.memory_space<vmem>>, vector<1x8xf32>,
    return
  }
  func.func @transform_0(%arg0: i32) -> (i32, i32) {
    %c0_i32 = arith.constant 0 : i32
    %c0_i32_0 = arith.constant 0 : i32
    return %arg0, %c0_i32 : i32, i32
  }
  func.func @transform_1(%arg0: i32) -> (i32, i32) {
    %c0_i32 = arith.constant 0 : i32
    %c0_i32_0 = arith.constant 0 : i32
    %c0_i32_1 = arith.constant 0 : i32
    return %c0_i32, %c0_i32_0 : i32, i32
  }
  func.func @transform_2(%arg0: i32) -> (i32, i32) {
    %c0_i32 = arith.constant 0 : i32
    %c0_i32_0 = arith.constant 0 : i32
    %c0_i32_1 = arith.constant 0 : i32
    return %c0_i32, %c0_i32_0 : i32, i32
  }
  func.func @transform_3(%arg0: i32) -> (i32, i32) {
    %c0_i32 = arith.constant 0 : i32
    %c0_i32_0 = arith.constant 0 : i32
    return %c0_i32, %arg0 : i32, i32
  }
}

</mosaic_0001>

<llo_original>
// kernel: tpu_custom_call.1
$region0: #{tpu_custom_call.1}
  #allocation0 [shape = 'u32[]', space=smem, size = 0x4, offset = 0x4, fixed_abs, tag = 'smem constant byte address 0x4 - core index']
  #allocation1 [shape = 'u32[144,128]{1,0:T(1,128)}', space=vmem, size = 0x12000, scoped, tag = 'internal scratch']
  %s0 = inlined_call_operand.vmem [shape: f32[8,20], index: 0, kind: input, shape index: {}]
  %s1 = inlined_call_operand.vmem [shape: f32[512,20], index: 1, kind: input, shape index: {}]
  %s2 = inlined_call_operand.vmem [shape: f32[1,512], index: 2, kind: input, shape index: {}]
  %s3 = inlined_call_operand.hbm [shape: f32[1,8], index: 3, kind: output, shape index: {}]
  %s4 = sld [smem:[#allocation0]]
  $region22: #{tpu_custom_call.1} parent=0
    _
  %s6 = ssub.s32 1, %s4
  %s7 = scalar_select 0, %s6, %s4
  $region1: #{tpu_custom_call.1} parent=0
    #allocation2 [shape = 'u8[512]{0}', space=vmem, size = 0x400, scoped, tag = 'output window, operand 0, single buffered']
    #allocation3 [shape = 's32[1]{0}', space=sflag, size = 0x4, scoped, tag = 'scoped memory for tpu_custom_call.1']
    %8 = vsyncpa [#allocation3], 0
    // Predicated region
    $region2: #{tpu_custom_call.1} parent=1 // pred_check
      _
    $region3: #{tpu_custom_call.1} parent=1 // pred_check_branch
      %10 = sbr.rel (0) target = $region5
    $region4: #{tpu_custom_call.1} parent=1 // pred_region
      _
    $region5: #{tpu_custom_call.1} parent=1 // pred_fallthru
      _
    // Predicated region
    $region6: #{tpu_custom_call.1} parent=1 // pred_check
      _
    $region7: #{tpu_custom_call.1} parent=1 // pred_check_branch
      %12 = sbr.rel (0) target = $region9
    $region8: #{tpu_custom_call.1} parent=1 // pred_region
      _
    $region9: #{tpu_custom_call.1} parent=1 // pred_fallthru
      _
    // Predicated region
    $region10: #{tpu_custom_call.1} parent=1 // pred_check
      _
    $region11: #{tpu_custom_call.1} parent=1 // pred_check_branch
      %14 = sbr.rel (0) target = $region13
    $region12: #{tpu_custom_call.1} parent=1 // pred_region
      _
    $region13: #{tpu_custom_call.1} parent=1 // pred_fallthru
      _
    %v15 = vld [vmem:[%s1] sm:$0xff]
    %v16 = vld [vmem:[%s1 + $0x8] sm:$0xff]
    %v17 = vld [vmem:[%s1 + $0x10] sm:$0xff]
    %v18 = vld [vmem:[%s1 + $0x18] sm:$0xff]
    %v19 = vld [vmem:[%s1 + $0x20] sm:$0xff]
    %v20 = vld [vmem:[%s1 + $0x28] sm:$0xff]
    %v21 = vld [vmem:[%s1 + $0x30] sm:$0xff]
    %v22 = vld [vmem:[%s1 + $0x38] sm:$0xff]
    %v23 = vld [vmem:[%s1 + $0x40] sm:$0xff]
    %v24 = vld [vmem:[%s1 + $0x48] sm:$0xff]
    %v25 = vld [vmem:[%s1 + $0x50] sm:$0xff]
    %v26 = vld [vmem:[%s1 + $0x58] sm:$0xff]
    %v27 = vld [vmem:[%s1 + $0x60] sm:$0xff]
    %v28 = vld [vmem:[%s1 + $0x68] sm:$0xff]
    %v29 = vld [vmem:[%s1 + $0x70] sm:$0xff]
    %v30 = vld [vmem:[%s1 + $0x78] sm:$0xff]
    %v31 = vld [vmem:[%s1 + $0x80] sm:$0xff]
    %v32 = vld [vmem:[%s1 + $0x88] sm:$0xff]
    %v33 = vld [vmem:[%s1 + $0x90] sm:$0xff]
    %v34 = vld [vmem:[%s1 + $0x98] sm:$0xff]
    %v35 = vld [vmem:[%s1 + $0xa0] sm:$0xff]
    %v36 = vld [vmem:[%s1 + $0xa8] sm:$0xff]
    %v37 = vld [vmem:[%s1 + $0xb0] sm:$0xff]
    %v38 = vld [vmem:[%s1 + $0xb8] sm:$0xff]
    %v39 = vld [vmem:[%s1 + $0xc0] sm:$0xff]
    %v40 = vld [vmem:[%s1 + $0xc8] sm:$0xff]
    %v41 = vld [vmem:[%s1 + $0xd0] sm:$0xff]
    %v42 = vld [vmem:[%s1 + $0xd8] sm:$0xff]
    %v43 = vld [vmem:[%s1 + $0xe0] sm:$0xff]
    %v44 = vld [vmem:[%s1 + $0xe8] sm:$0xff]
    %v45 = vld [vmem:[%s1 + $0xf0] sm:$0xff]
    %v46 = vld [vmem:[%s1 + $0xf8] sm:$0xff]
    %v47 = vld [vmem:[%s1 + $0x100] sm:$0xff]
    %v48 = vld [vmem:[%s1 + $0x108] sm:$0xff]
    %v49 = vld [vmem:[%s1 + $0x110] sm:$0xff]
    %v50 = vld [vmem:[%s1 + $0x118] sm:$0xff]
    %v51 = vld [vmem:[%s1 + $0x120] sm:$0xff]
    %v52 = vld [vmem:[%s1 + $0x128] sm:$0xff]
    %v53 = vld [vmem:[%s1 + $0x130] sm:$0xff]
    %v54 = vld [vmem:[%s1 + $0x138] sm:$0xff]
    %v55 = vld [vmem:[%s1 + $0x140] sm:$0xff]
    %v56 = vld [vmem:[%s1 + $0x148] sm:$0xff]
    %v57 = vld [vmem:[%s1 + $0x150] sm:$0xff]
    %v58 = vld [vmem:[%s1 + $0x158] sm:$0xff]
    %v59 = vld [vmem:[%s1 + $0x160] sm:$0xff]
    %v60 = vld [vmem:[%s1 + $0x168] sm:$0xff]
    %v61 = vld [vmem:[%s1 + $0x170] sm:$0xff]
    %v62 = vld [vmem:[%s1 + $0x178] sm:$0xff]
    %v63 = vld [vmem:[%s1 + $0x180] sm:$0xff]
    %v64 = vld [vmem:[%s1 + $0x188] sm:$0xff]
    %v65 = vld [vmem:[%s1 + $0x190] sm:$0xff]
    %v66 = vld [vmem:[%s1 + $0x198] sm:$0xff]
    %v67 = vld [vmem:[%s1 + $0x1a0] sm:$0xff]
    %v68 = vld [vmem:[%s1 + $0x1a8] sm:$0xff]
    %v69 = vld [vmem:[%s1 + $0x1b0] sm:$0xff]
    %v70 = vld [vmem:[%s1 + $0x1b8] sm:$0xff]
    %v71 = vld [vmem:[%s1 + $0x1c0] sm:$0xff]
    %v72 = vld [vmem:[%s1 + $0x1c8] sm:$0xff]
    %v73 = vld [vmem:[%s1 + $0x1d0] sm:$0xff]
    %v74 = vld [vmem:[%s1 + $0x1d8] sm:$0xff]
    %v75 = vld [vmem:[%s1 + $0x1e0] sm:$0xff]
    %v76 = vld [vmem:[%s1 + $0x1e8] sm:$0xff]
    %v77 = vld [vmem:[%s1 + $0x1f0] sm:$0xff]
    %v78 = vld [vmem:[%s1 + $0x1f8] sm:$0xff]
    %v79 = vld [vmem:[%s0] sm:$0xff]
    %vm80 = vcmask 162816
    %v82 = vsel %vm80, %v15, 0
    %v85 = vsel %vm80, %v16, 0
    %v88 = vsel %vm80, %v17, 0
    %v91 = vsel %vm80, %v18, 0
    %v94 = vsel %vm80, %v19, 0
    %v97 = vsel %vm80, %v20, 0
    %v100 = vsel %vm80, %v21, 0
    %v103 = vsel %vm80, %v22, 0
    %v106 = vsel %vm80, %v23, 0
    %v109 = vsel %vm80, %v24, 0
    %v112 = vsel %vm80, %v25, 0
    %v115 = vsel %vm80, %v26, 0
    %v118 = vsel %vm80, %v27, 0
    %v121 = vsel %vm80, %v28, 0
    %v124 = vsel %vm80, %v29, 0
    %v127 = vsel %vm80, %v30, 0
    %v130 = vsel %vm80, %v31, 0
    %v133 = vsel %vm80, %v32, 0
    %v136 = vsel %vm80, %v33, 0
    %v139 = vsel %vm80, %v34, 0
    %v142 = vsel %vm80, %v35, 0
    %v145 = vsel %vm80, %v36, 0
    %v148 = vsel %vm80, %v37, 0
    %v151 = vsel %vm80, %v38, 0
    %v154 = vsel %vm80, %v39, 0
    %v157 = vsel %vm80, %v40, 0
    %v160 = vsel %vm80, %v41, 0
    %v163 = vsel %vm80, %v42, 0
    %v166 = vsel %vm80, %v43, 0
    %v169 = vsel %vm80, %v44, 0
    %v172 = vsel %vm80, %v45, 0
    %v175 = vsel %vm80, %v46, 0
    %v178 = vsel %vm80, %v47, 0
    %v181 = vsel %vm80, %v48, 0
    %v184 = vsel %vm80, %v49, 0
    %v187 = vsel %vm80, %v50, 0
    %v190 = vsel %vm80, %v51, 0
    %v193 = vsel %vm80, %v52, 0
    %v196 = vsel %vm80, %v53, 0
    %v199 = vsel %vm80, %v54, 0
    %v202 = vsel %vm80, %v55, 0
    %v205 = vsel %vm80, %v56, 0
    %v208 = vsel %vm80, %v57, 0
    %v211 = vsel %vm80, %v58, 0
    %v214 = vsel %vm80, %v59, 0
    %v217 = vsel %vm80, %v60, 0
    %v220 = vsel %vm80, %v61, 0
    %v223 = vsel %vm80, %v62, 0
    %v226 = vsel %vm80, %v63, 0
    %v229 = vsel %vm80, %v64, 0
    %v232 = vsel %vm80, %v65, 0
    %v235 = vsel %vm80, %v66, 0
    %v238 = vsel %vm80, %v67, 0
    %v241 = vsel %vm80, %v68, 0
    %v244 = vsel %vm80, %v69, 0
    %v247 = vsel %vm80, %v70, 0
    %v250 = vsel %vm80, %v71, 0
    %v253 = vsel %vm80, %v72, 0
    %v256 = vsel %vm80, %v73, 0
    %v259 = vsel %vm80, %v74, 0
    %v262 = vsel %vm80, %v75, 0
    %v265 = vsel %vm80, %v76, 0
    %v268 = vsel %vm80, %v77, 0
    %v271 = vsel %vm80, %v78, 0
    %v274 = vsel %vm80, %v79, 0
    %276 = vmatprep.subr.mxu0 0.0
    %277 = vmatpush1.xpose.msra.mxu0 0.0
    %278 = vmatprep.subr.mxu0 0.0
    %279 = vmatpush1.xpose.msra.mxu0 0.0
    %280 = vmatprep.subr.mxu0 0.0
    %281 = vmatpush1.xpose.msra.mxu0 0.0
    %282 = vmatprep.subr.mxu0 0.0
    %283 = vmatpush1.xpose.msra.mxu0 0.0
    %284 = vmatprep.subr.mxu0 0.0
    %285 = vmatpush1.xpose.msra.mxu0 0.0
    %286 = vmatprep.subr.mxu0 0.0
    %287 = vmatpush1.xpose.msra.mxu0 0.0
    %288 = vmatprep.subr.mxu0 0.0
    %289 = vmatpush1.xpose.msra.mxu0 0.0
    %290 = vmatprep.subr.mxu0 0.0
    %291 = vmatpush1.xpose.msra.mxu0 0.0
    %292 = vmatprep.subr.mxu0 0.0
    %293 = vmatpush1.xpose.msra.mxu0 0.0
    %294 = vmatprep.subr.mxu0 0.0
    %295 = vmatpush1.xpose.msra.mxu0 0.0
    %296 = vmatprep.subr.mxu0 0.0
    %297 = vmatpush1.xpose.msra.mxu0 0.0
    %298 = vmatprep.subr.mxu0 0.0
    %299 = vmatpush1.xpose.msra.mxu0 0.0
    %300 = vmatprep.subr.mxu0 0.0
    %301 = vmatpush1.xpose.msra.mxu0 0.0
    %302 = vmatprep.subr.mxu0 0.0
    %303 = vmatpush1.xpose.msra.mxu0 0.0
    %304 = vmatprep.subr.mxu0 0.0
    %305 = vmatpush1.xpose.msra.mxu0 0.0
    %306 = vmatprep.subr.mxu0 0.0
    %307 = vmatpush1.xpose.msra.mxu0 %v274
    %308 = vmatprep.subr.mxu0 0.0
    %309 = vmatpush2.xpose.msra.mxu0 0.0
    %310 = vmatprep.subr.mxu0 0.0
    %311 = vmatpush2.xpose.msra.mxu0 0.0
    %312 = vmatprep.subr.mxu0 0.0
    %313 = vmatpush2.xpose.msra.mxu0 0.0
    %314 = vmatprep.subr.mxu0 0.0
    %315 = vmatpush2.xpose.msra.mxu0 0.0
    %316 = vmatprep.subr.mxu0 0.0
    %317 = vmatpush2.xpose.msra.mxu0 0.0
    %318 = vmatprep.subr.mxu0 0.0
    %319 = vmatpush2.xpose.msra.mxu0 0.0
    %320 = vmatprep.subr.mxu0 0.0
    %321 = vmatpush2.xpose.msra.mxu0 0.0
    %322 = vmatprep.subr.mxu0 0.0
    %323 = vmatpush2.xpose.msra.mxu0 0.0
    %324 = vmatprep.subr.mxu0 0.0
    %325 = vmatpush2.xpose.msra.mxu0 0.0
    %326 = vmatprep.subr.mxu0 0.0
    %327 = vmatpush2.xpose.msra.mxu0 0.0
    %328 = vmatprep.subr.mxu0 0.0
    %329 = vmatpush2.xpose.msra.mxu0 0.0
    %330 = vmatprep.subr.mxu0 0.0
    %331 = vmatpush2.xpose.msra.mxu0 0.0
    %332 = vmatprep.subr.mxu0 0.0
    %333 = vmatpush2.xpose.msra.mxu0 0.0
    %334 = vmatprep.subr.mxu0 0.0
    %335 = vmatpush2.xpose.msra.mxu0 0.0
    %336 = vmatprep.subr.mxu0 0.0
    %337 = vmatpush2.xpose.msra.mxu0 0.0
    %338 = vmatprep.subr.mxu0 0.0
    %339 = vmatpush2.xpose.msra.mxu0 0.0
    %340 = vmatprep.mubr.f32.mxu0 0.0
    %341 = vmatmul.mubr.f32.gmra.mxu0 %v82
    %v342 = vpop.f32.mrf.mxu0
    %v343 = vadd.f32 0.0, %v342
    %v344 = vpop.f32.mrf.mxu0
    %345 = vmatprep.mubr.f32.mxu0 0.0
    %346 = vmatmul.mubr.f32.gmra.mxu0 %v85
    %v347 = vpop.f32.mrf.mxu0
    %v348 = vadd.f32 0.0, %v347
    %v349 = vpop.f32.mrf.mxu0
    %350 = vmatprep.mubr.f32.mxu0 0.0
    %351 = vmatmul.mubr.f32.gmra.mxu0 %v88
    %v352 = vpop.f32.mrf.mxu0
    %v353 = vadd.f32 0.0, %v352
    %v354 = vpop.f32.mrf.mxu0
    %355 = vmatprep.mubr.f32.mxu0 0.0
    %356 = vmatmul.mubr.f32.gmra.mxu0 %v91
    %v357 = vpop.f32.mrf.mxu0
    %v358 = vadd.f32 0.0, %v357
    %v359 = vpop.f32.mrf.mxu0
    %360 = vmatprep.mubr.f32.mxu0 0.0
    %361 = vmatmul.mubr.f32.gmra.mxu0 %v94
    %v362 = vpop.f32.mrf.mxu0
    %v363 = vadd.f32 0.0, %v362
    %v364 = vpop.f32.mrf.mxu0
    %365 = vmatprep.mubr.f32.mxu0 0.0
    %366 = vmatmul.mubr.f32.gmra.mxu0 %v97
    %v367 = vpop.f32.mrf.mxu0
    %v368 = vadd.f32 0.0, %v367
    %v369 = vpop.f32.mrf.mxu0
    %370 = vmatprep.mubr.f32.mxu0 0.0
    %371 = vmatmul.mubr.f32.gmra.mxu0 %v100
    %v372 = vpop.f32.mrf.mxu0
    %v373 = vadd.f32 0.0, %v372
    %v374 = vpop.f32.mrf.mxu0
    %375 = vmatprep.mubr.f32.mxu0 0.0
    %376 = vmatmul.mubr.f32.gmra.mxu0 %v103
    %v377 = vpop.f32.mrf.mxu0
    %v378 = vadd.f32 0.0, %v377
    %v379 = vpop.f32.mrf.mxu0
    %380 = vmatprep.mubr.f32.mxu0 0.0
    %381 = vmatmul.mubr.f32.gmra.mxu0 %v106
    %v382 = vpop.f32.mrf.mxu0
    %v383 = vadd.f32 0.0, %v382
    %v384 = vpop.f32.mrf.mxu0
    %385 = vmatprep.mubr.f32.mxu0 0.0
    %386 = vmatmul.mubr.f32.gmra.mxu0 %v109
    %v387 = vpop.f32.mrf.mxu0
    %v388 = vadd.f32 0.0, %v387
    %v389 = vpop.f32.mrf.mxu0
    %390 = vmatprep.mubr.f32.mxu0 0.0
    %391 = vmatmul.mubr.f32.gmra.mxu0 %v112
    %v392 = vpop.f32.mrf.mxu0
    %v393 = vadd.f32 0.0, %v392
    %v394 = vpop.f32.mrf.mxu0
    %395 = vmatprep.mubr.f32.mxu0 0.0
    %396 = vmatmul.mubr.f32.gmra.mxu0 %v115
    %v397 = vpop.f32.mrf.mxu0
    %v398 = vadd.f32 0.0, %v397
    %v399 = vpop.f32.mrf.mxu0
    %400 = vmatprep.mubr.f32.mxu0 0.0
    %401 = vmatmul.mubr.f32.gmra.mxu0 %v118
    %v402 = vpop.f32.mrf.mxu0
    %v403 = vadd.f32 0.0, %v402
    %v404 = vpop.f32.mrf.mxu0
    %405 = vmatprep.mubr.f32.mxu0 0.0
    %406 = vmatmul.mubr.f32.gmra.mxu0 %v121
    %v407 = vpop.f32.mrf.mxu0
    %v408 = vadd.f32 0.0, %v407
    %v409 = vpop.f32.mrf.mxu0
    %410 = vmatprep.mubr.f32.mxu0 0.0
    %411 = vmatmul.mubr.f32.gmra.mxu0 %v124
    %v412 = vpop.f32.mrf.mxu0
    %v413 = vadd.f32 0.0, %v412
    %v414 = vpop.f32.mrf.mxu0
    %415 = vmatprep.mubr.f32.mxu0 0.0
    %416 = vmatmul.mubr.f32.gmra.mxu0 %v127
    %v417 = vpop.f32.mrf.mxu0
    %v418 = vadd.f32 0.0, %v417
    %v419 = vpop.f32.mrf.mxu0
    %420 = vmatprep.mubr.f32.mxu0 0.0
    %421 = vmatmul.mubr.f32.gmra.mxu0 %v130
    %v422 = vpop.f32.mrf.mxu0
    %v423 = vadd.f32 0.0, %v422
    %v424 = vpop.f32.mrf.mxu0
    %425 = vmatprep.mubr.f32.mxu0 0.0
    %426 = vmatmul.mubr.f32.gmra.mxu0 %v133
    %v427 = vpop.f32.mrf.mxu0
    %v428 = vadd.f32 0.0, %v427
    %v429 = vpop.f32.mrf.mxu0
    %430 = vmatprep.mubr.f32.mxu0 0.0
    %431 = vmatmul.mubr.f32.gmra.mxu0 %v136
    %v432 = vpop.f32.mrf.mxu0
    %v433 = vadd.f32 0.0, %v432
    %v434 = vpop.f32.mrf.mxu0
    %435 = vmatprep.mubr.f32.mxu0 0.0
    %436 = vmatmul.mubr.f32.gmra.mxu0 %v139
    %v437 = vpop.f32.mrf.mxu0
    %v438 = vadd.f32 0.0, %v437
    %v439 = vpop.f32.mrf.mxu0
    %440 = vmatprep.mubr.f32.mxu0 0.0
    %441 = vmatmul.mubr.f32.gmra.mxu0 %v142
    %v442 = vpop.f32.mrf.mxu0
    %v443 = vadd.f32 0.0, %v442
    %v444 = vpop.f32.mrf.mxu0
    %445 = vmatprep.mubr.f32.mxu0 0.0
    %446 = vmatmul.mubr.f32.gmra.mxu0 %v145
    %v447 = vpop.f32.mrf.mxu0
    %v448 = vadd.f32 0.0, %v447
    %v449 = vpop.f32.mrf.mxu0
    %450 = vmatprep.mubr.f32.mxu0 0.0
    %451 = vmatmul.mubr.f32.gmra.mxu0 %v148
    %v452 = vpop.f32.mrf.mxu0
    %v453 = vadd.f32 0.0, %v452
    %v454 = vpop.f32.mrf.mxu0
    %455 = vmatprep.mubr.f32.mxu0 0.0
    %456 = vmatmul.mubr.f32.gmra.mxu0 %v151
    %v457 = vpop.f32.mrf.mxu0
    %v458 = vadd.f32 0.0, %v457
    %v459 = vpop.f32.mrf.mxu0
    %460 = vmatprep.mubr.f32.mxu0 0.0
    %461 = vmatmul.mubr.f32.gmra.mxu0 %v154
    %v462 = vpop.f32.mrf.mxu0
    %v463 = vadd.f32 0.0, %v462
    %v464 = vpop.f32.mrf.mxu0
    %465 = vmatprep.mubr.f32.mxu0 0.0
    %466 = vmatmul.mubr.f32.gmra.mxu0 %v157
    %v467 = vpop.f32.mrf.mxu0
    %v468 = vadd.f32 0.0, %v467
    %v469 = vpop.f32.mrf.mxu0
    %470 = vmatprep.mubr.f32.mxu0 0.0
    %471 = vmatmul.mubr.f32.gmra.mxu0 %v160
    %v472 = vpop.f32.mrf.mxu0
    %v473 = vadd.f32 0.0, %v472
    %v474 = vpop.f32.mrf.mxu0
    %475 = vmatprep.mubr.f32.mxu0 0.0
    %476 = vmatmul.mubr.f32.gmra.mxu0 %v163
    %v477 = vpop.f32.mrf.mxu0
    %v478 = vadd.f32 0.0, %v477
    %v479 = vpop.f32.mrf.mxu0
    %480 = vmatprep.mubr.f32.mxu0 0.0
    %481 = vmatmul.mubr.f32.gmra.mxu0 %v166
    %v482 = vpop.f32.mrf.mxu0
    %v483 = vadd.f32 0.0, %v482
    %v484 = vpop.f32.mrf.mxu0
    %485 = vmatprep.mubr.f32.mxu0 0.0
    %486 = vmatmul.mubr.f32.gmra.mxu0 %v169
    %v487 = vpop.f32.mrf.mxu0
    %v488 = vadd.f32 0.0, %v487
    %v489 = vpop.f32.mrf.mxu0
    %490 = vmatprep.mubr.f32.mxu0 0.0
    %491 = vmatmul.mubr.f32.gmra.mxu0 %v172
    %v492 = vpop.f32.mrf.mxu0
    %v493 = vadd.f32 0.0, %v492
    %v494 = vpop.f32.mrf.mxu0
    %495 = vmatprep.mubr.f32.mxu0 0.0
    %496 = vmatmul.mubr.f32.gmra.mxu0 %v175
    %v497 = vpop.f32.mrf.mxu0
    %v498 = vadd.f32 0.0, %v497
    %v499 = vpop.f32.mrf.mxu0
    %500 = vmatprep.mubr.f32.mxu0 0.0
    %501 = vmatmul.mubr.f32.gmra.mxu0 %v178
    %v502 = vpop.f32.mrf.mxu0
    %v503 = vadd.f32 0.0, %v502
    %v504 = vpop.f32.mrf.mxu0
    %505 = vmatprep.mubr.f32.mxu0 0.0
    %506 = vmatmul.mubr.f32.gmra.mxu0 %v181
    %v507 = vpop.f32.mrf.mxu0
    %v508 = vadd.f32 0.0, %v507
    %v509 = vpop.f32.mrf.mxu0
    %510 = vmatprep.mubr.f32.mxu0 0.0
    %511 = vmatmul.mubr.f32.gmra.mxu0 %v184
    %v512 = vpop.f32.mrf.mxu0
    %v513 = vadd.f32 0.0, %v512
    %v514 = vpop.f32.mrf.mxu0
    %515 = vmatprep.mubr.f32.mxu0 0.0
    %516 = vmatmul.mubr.f32.gmra.mxu0 %v187
    %v517 = vpop.f32.mrf.mxu0
    %v518 = vadd.f32 0.0, %v517
    %v519 = vpop.f32.mrf.mxu0
    %520 = vmatprep.mubr.f32.mxu0 0.0
    %521 = vmatmul.mubr.f32.gmra.mxu0 %v190
    %v522 = vpop.f32.mrf.mxu0
    %v523 = vadd.f32 0.0, %v522
    %v524 = vpop.f32.mrf.mxu0
    %525 = vmatprep.mubr.f32.mxu0 0.0
    %526 = vmatmul.mubr.f32.gmra.mxu0 %v193
    %v527 = vpop.f32.mrf.mxu0
    %v528 = vadd.f32 0.0, %v527
    %v529 = vpop.f32.mrf.mxu0
    %530 = vmatprep.mubr.f32.mxu0 0.0
    %531 = vmatmul.mubr.f32.gmra.mxu0 %v196
    %v532 = vpop.f32.mrf.mxu0
    %v533 = vadd.f32 0.0, %v532
    %v534 = vpop.f32.mrf.mxu0
    %535 = vmatprep.mubr.f32.mxu0 0.0
    %536 = vmatmul.mubr.f32.gmra.mxu0 %v199
    %v537 = vpop.f32.mrf.mxu0
    %v538 = vadd.f32 0.0, %v537
    %v539 = vpop.f32.mrf.mxu0
    %540 = vmatprep.mubr.f32.mxu0 0.0
    %541 = vmatmul.mubr.f32.gmra.mxu0 %v202
    %v542 = vpop.f32.mrf.mxu0
    %v543 = vadd.f32 0.0, %v542
    %v544 = vpop.f32.mrf.mxu0
    %545 = vmatprep.mubr.f32.mxu0 0.0
    %546 = vmatmul.mubr.f32.gmra.mxu0 %v205
    %v547 = vpop.f32.mrf.mxu0
    %v548 = vadd.f32 0.0, %v547
    %v549 = vpop.f32.mrf.mxu0
    %550 = vmatprep.mubr.f32.mxu0 0.0
    %551 = vmatmul.mubr.f32.gmra.mxu0 %v208
    %v552 = vpop.f32.mrf.mxu0
    %v553 = vadd.f32 0.0, %v552
    %v554 = vpop.f32.mrf.mxu0
    %555 = vmatprep.mubr.f32.mxu0 0.0
    %556 = vmatmul.mubr.f32.gmra.mxu0 %v211
    %v557 = vpop.f32.mrf.mxu0
    %v558 = vadd.f32 0.0, %v557
    %v559 = vpop.f32.mrf.mxu0
    %560 = vmatprep.mubr.f32.mxu0 0.0
    %561 = vmatmul.mubr.f32.gmra.mxu0 %v214
    %v562 = vpop.f32.mrf.mxu0
    %v563 = vadd.f32 0.0, %v562
    %v564 = vpop.f32.mrf.mxu0
    %565 = vmatprep.mubr.f32.mxu0 0.0
    %566 = vmatmul.mubr.f32.gmra.mxu0 %v217
    %v567 = vpop.f32.mrf.mxu0
    %v568 = vadd.f32 0.0, %v567
    %v569 = vpop.f32.mrf.mxu0
    %570 = vmatprep.mubr.f32.mxu0 0.0
    %571 = vmatmul.mubr.f32.gmra.mxu0 %v220
    %v572 = vpop.f32.mrf.mxu0
    %v573 = vadd.f32 0.0, %v572
    %v574 = vpop.f32.mrf.mxu0
    %575 = vmatprep.mubr.f32.mxu0 0.0
    %576 = vmatmul.mubr.f32.gmra.mxu0 %v223
    %v577 = vpop.f32.mrf.mxu0
    %v578 = vadd.f32 0.0, %v577
    %v579 = vpop.f32.mrf.mxu0
    %580 = vmatprep.mubr.f32.mxu0 0.0
    %581 = vmatmul.mubr.f32.gmra.mxu0 %v226
    %v582 = vpop.f32.mrf.mxu0
    %v583 = vadd.f32 0.0, %v582
    %v584 = vpop.f32.mrf.mxu0
    %585 = vmatprep.mubr.f32.mxu0 0.0
    %586 = vmatmul.mubr.f32.gmra.mxu0 %v229
    %v587 = vpop.f32.mrf.mxu0
    %v588 = vadd.f32 0.0, %v587
    %v589 = vpop.f32.mrf.mxu0
    %590 = vmatprep.mubr.f32.mxu0 0.0
    %591 = vmatmul.mubr.f32.gmra.mxu0 %v232
    %v592 = vpop.f32.mrf.mxu0
    %v593 = vadd.f32 0.0, %v592
    %v594 = vpop.f32.mrf.mxu0
    %595 = vmatprep.mubr.f32.mxu0 0.0
    %596 = vmatmul.mubr.f32.gmra.mxu0 %v235
    %v597 = vpop.f32.mrf.mxu0
    %v598 = vadd.f32 0.0, %v597
    %v599 = vpop.f32.mrf.mxu0
    %600 = vmatprep.mubr.f32.mxu0 0.0
    %601 = vmatmul.mubr.f32.gmra.mxu0 %v238
    %v602 = vpop.f32.mrf.mxu0
    %v603 = vadd.f32 0.0, %v602
    %v604 = vpop.f32.mrf.mxu0
    %605 = vmatprep.mubr.f32.mxu0 0.0
    %606 = vmatmul.mubr.f32.gmra.mxu0 %v241
    %v607 = vpop.f32.mrf.mxu0
    %v608 = vadd.f32 0.0, %v607
    %v609 = vpop.f32.mrf.mxu0
    %610 = vmatprep.mubr.f32.mxu0 0.0
    %611 = vmatmul.mubr.f32.gmra.mxu0 %v244
    %v612 = vpop.f32.mrf.mxu0
    %v613 = vadd.f32 0.0, %v612
    %v614 = vpop.f32.mrf.mxu0
    %615 = vmatprep.mubr.f32.mxu0 0.0
    %616 = vmatmul.mubr.f32.gmra.mxu0 %v247
    %v617 = vpop.f32.mrf.mxu0
    %v618 = vadd.f32 0.0, %v617
    %v619 = vpop.f32.mrf.mxu0
    %620 = vmatprep.mubr.f32.mxu0 0.0
    %621 = vmatmul.mubr.f32.gmra.mxu0 %v250
    %v622 = vpop.f32.mrf.mxu0
    %v623 = vadd.f32 0.0, %v622
    %v624 = vpop.f32.mrf.mxu0
    %625 = vmatprep.mubr.f32.mxu0 0.0
    %626 = vmatmul.mubr.f32.gmra.mxu0 %v253
    %v627 = vpop.f32.mrf.mxu0
    %v628 = vadd.f32 0.0, %v627
    %v629 = vpop.f32.mrf.mxu0
    %630 = vmatprep.mubr.f32.mxu0 0.0
    %631 = vmatmul.mubr.f32.gmra.mxu0 %v256
    %v632 = vpop.f32.mrf.mxu0
    %v633 = vadd.f32 0.0, %v632
    %v634 = vpop.f32.mrf.mxu0
    %635 = vmatprep.mubr.f32.mxu0 0.0
    %636 = vmatmul.mubr.f32.gmra.mxu0 %v259
    %v637 = vpop.f32.mrf.mxu0
    %v638 = vadd.f32 0.0, %v637
    %v639 = vpop.f32.mrf.mxu0
    %640 = vmatprep.mubr.f32.mxu0 0.0
    %641 = vmatmul.mubr.f32.gmra.mxu0 %v262
    %v642 = vpop.f32.mrf.mxu0
    %v643 = vadd.f32 0.0, %v642
    %v644 = vpop.f32.mrf.mxu0
    %645 = vmatprep.mubr.f32.mxu0 0.0
    %646 = vmatmul.mubr.f32.gmra.mxu0 %v265
    %v647 = vpop.f32.mrf.mxu0
    %v648 = vadd.f32 0.0, %v647
    %v649 = vpop.f32.mrf.mxu0
    %650 = vmatprep.mubr.f32.mxu0 0.0
    %651 = vmatmul.mubr.f32.gmra.mxu0 %v268
    %v652 = vpop.f32.mrf.mxu0
    %v653 = vadd.f32 0.0, %v652
    %v654 = vpop.f32.mrf.mxu0
    %655 = vmatprep.mubr.f32.mxu0 0.0
    %656 = vmatmul.mubr.f32.gmra.mxu0 %v271
    %v657 = vpop.f32.mrf.mxu0
    %v658 = vadd.f32 0.0, %v657
    %v659 = vpop.f32.mrf.mxu0
    %660 = vdwg.mxu0
    %v661 = vmax.f32 %v343, 0.0
    %v662 = vmax.f32 %v348, 0.0
    %v663 = vmax.f32 %v353, 0.0
    %v664 = vmax.f32 %v358, 0.0
    %v665 = vmax.f32 %v363, 0.0
    %v666 = vmax.f32 %v368, 0.0
    %v667 = vmax.f32 %v373, 0.0
    %v668 = vmax.f32 %v378, 0.0
    %v669 = vmax.f32 %v383, 0.0
    %v670 = vmax.f32 %v388, 0.0
    %v671 = vmax.f32 %v393, 0.0
    %v672 = vmax.f32 %v398, 0.0
    %v673 = vmax.f32 %v403, 0.0
    %v674 = vmax.f32 %v408, 0.0
    %v675 = vmax.f32 %v413, 0.0
    %v676 = vmax.f32 %v418, 0.0
    %v677 = vmax.f32 %v423, 0.0
    %v678 = vmax.f32 %v428, 0.0
    %v679 = vmax.f32 %v433, 0.0
    %v680 = vmax.f32 %v438, 0.0
    %v681 = vmax.f32 %v443, 0.0
    %v682 = vmax.f32 %v448, 0.0
    %v683 = vmax.f32 %v453, 0.0
    %v684 = vmax.f32 %v458, 0.0
    %v685 = vmax.f32 %v463, 0.0
    %v686 = vmax.f32 %v468, 0.0
    %v687 = vmax.f32 %v473, 0.0
    %v688 = vmax.f32 %v478, 0.0
    %v689 = vmax.f32 %v483, 0.0
    %v690 = vmax.f32 %v488, 0.0
    %v691 = vmax.f32 %v493, 0.0
    %v692 = vmax.f32 %v498, 0.0
    %v693 = vmax.f32 %v503, 0.0
    %v694 = vmax.f32 %v508, 0.0
    %v695 = vmax.f32 %v513, 0.0
    %v696 = vmax.f32 %v518, 0.0
    %v697 = vmax.f32 %v523, 0.0
    %v698 = vmax.f32 %v528, 0.0
    %v699 = vmax.f32 %v533, 0.0
    %v700 = vmax.f32 %v538, 0.0
    %v701 = vmax.f32 %v543, 0.0
    %v702 = vmax.f32 %v548, 0.0
    %v703 = vmax.f32 %v553, 0.0
    %v704 = vmax.f32 %v558, 0.0
    %v705 = vmax.f32 %v563, 0.0
    %v706 = vmax.f32 %v568, 0.0
    %v707 = vmax.f32 %v573, 0.0
    %v708 = vmax.f32 %v578, 0.0
    %v709 = vmax.f32 %v583, 0.0
    %v710 = vmax.f32 %v588, 0.0
    %v711 = vmax.f32 %v593, 0.0
    %v712 = vmax.f32 %v598, 0.0
    %v713 = vmax.f32 %v603, 0.0
    %v714 = vmax.f32 %v608, 0.0
    %v715 = vmax.f32 %v613, 0.0
    %v716 = vmax.f32 %v618, 0.0
    %v717 = vmax.f32 %v623, 0.0
    %v718 = vmax.f32 %v628, 0.0
    %v719 = vmax.f32 %v633, 0.0
    %v720 = vmax.f32 %v638, 0.0
    %v721 = vmax.f32 %v643, 0.0
    %v722 = vmax.f32 %v648, 0.0
    %v723 = vmax.f32 %v653, 0.0
    %v724 = vmax.f32 %v658, 0.0
    %v725 = vld [vmem:[%s2] sm:$0xf]
    %v727 = vlaneseq
    %v728 = vshrl.u32 %v727, 7
    %v729 = vsub.s32 0, %v728
    %v730 = vrot.slane %v725, %v729
    %v731 = vlaneseq
    %v732 = vshrl.u32 %v731, 7
    %v733 = vsub.s32 1, %v732
    %v734 = vrot.slane %v725, %v733
    %v735 = vlaneseq
    %v736 = vshrl.u32 %v735, 7
    %v737 = vsub.s32 2, %v736
    %v738 = vrot.slane %v725, %v737
    %v739 = vlaneseq
    %v740 = vshrl.u32 %v739, 7
    %v741 = vsub.s32 3, %v740
    %v742 = vrot.slane %v725, %v741
    %747 = vmatprep.subr.mxu0 0.0
    %748 = vmatpush1.msra.mxu0 %v676
    %749 = vmatprep.subr.mxu0 0.0
    %750 = vmatpush1.msra.mxu0 %v675
    %751 = vmatprep.subr.mxu0 0.0
    %752 = vmatpush1.msra.mxu0 %v674
    %753 = vmatprep.subr.mxu0 0.0
    %754 = vmatpush1.msra.mxu0 %v673
    %755 = vmatprep.subr.mxu0 0.0
    %756 = vmatpush1.msra.mxu0 %v672
    %757 = vmatprep.subr.mxu0 0.0
    %758 = vmatpush1.msra.mxu0 %v671
    %759 = vmatprep.subr.mxu0 0.0
    %760 = vmatpush1.msra.mxu0 %v670
    %761 = vmatprep.subr.mxu0 0.0
    %762 = vmatpush1.msra.mxu0 %v669
    %763 = vmatprep.subr.mxu0 0.0
    %764 = vmatpush1.msra.mxu0 %v668
    %765 = vmatprep.subr.mxu0 0.0
    %766 = vmatpush1.msra.mxu0 %v667
    %767 = vmatprep.subr.mxu0 0.0
    %768 = vmatpush1.msra.mxu0 %v666
    %769 = vmatprep.subr.mxu0 0.0
    %770 = vmatpush1.msra.mxu0 %v665
    %771 = vmatprep.subr.mxu0 0.0
    %772 = vmatpush1.msra.mxu0 %v664
    %773 = vmatprep.subr.mxu0 0.0
    %774 = vmatpush1.msra.mxu0 %v663
    %775 = vmatprep.subr.mxu0 0.0
    %776 = vmatpush1.msra.mxu0 %v662
    %777 = vmatprep.subr.mxu0 0.0
    %778 = vmatpush1.msra.mxu0 %v661
    %779 = vmatprep.subr.mxu0 0.0
    %780 = vmatpush2.msra.mxu0 %v692
    %781 = vmatprep.subr.mxu0 0.0
    %782 = vmatpush2.msra.mxu0 %v691
    %783 = vmatprep.subr.mxu0 0.0
    %784 = vmatpush2.msra.mxu0 %v690
    %785 = vmatprep.subr.mxu0 0.0
    %786 = vmatpush2.msra.mxu0 %v689
    %787 = vmatprep.subr.mxu0 0.0
    %788 = vmatpush2.msra.mxu0 %v688
    %789 = vmatprep.subr.mxu0 0.0
    %790 = vmatpush2.msra.mxu0 %v687
    %791 = vmatprep.subr.mxu0 0.0
    %792 = vmatpush2.msra.mxu0 %v686
    %793 = vmatprep.subr.mxu0 0.0
    %794 = vmatpush2.msra.mxu0 %v685
    %795 = vmatprep.subr.mxu0 0.0
    %796 = vmatpush2.msra.mxu0 %v684
    %797 = vmatprep.subr.mxu0 0.0
    %798 = vmatpush2.msra.mxu0 %v683
    %799 = vmatprep.subr.mxu0 0.0
    %800 = vmatpush2.msra.mxu0 %v682
    %801 = vmatprep.subr.mxu0 0.0
    %802 = vmatpush2.msra.mxu0 %v681
    %803 = vmatprep.subr.mxu0 0.0
    %804 = vmatpush2.msra.mxu0 %v680
    %805 = vmatprep.subr.mxu0 0.0
    %806 = vmatpush2.msra.mxu0 %v679
    %807 = vmatprep.subr.mxu0 0.0
    %808 = vmatpush2.msra.mxu0 %v678
    %809 = vmatprep.subr.mxu0 0.0
    %810 = vmatpush2.msra.mxu0 %v677
    %811 = vmatprep.mubr.f32.mxu0 %v734
    %812 = vmatmul.mubr.f32.gmra.mxu0 %v730
    %v813 = vpop.f32.mrf.mxu0
    %v814 = vadd.f32 0.0, %v813
    %v815 = vpop.f32.mrf.mxu0
    %816 = vdwg.mxu0
    %817 = vmatprep.subr.mxu0 0.0
    %818 = vmatpush1.msra.mxu0 %v708
    %819 = vmatprep.subr.mxu0 0.0
    %820 = vmatpush1.msra.mxu0 %v707
    %821 = vmatprep.subr.mxu0 0.0
    %822 = vmatpush1.msra.mxu0 %v706
    %823 = vmatprep.subr.mxu0 0.0
    %824 = vmatpush1.msra.mxu0 %v705
    %825 = vmatprep.subr.mxu0 0.0
    %826 = vmatpush1.msra.mxu0 %v704
    %827 = vmatprep.subr.mxu0 0.0
    %828 = vmatpush1.msra.mxu0 %v703
    %829 = vmatprep.subr.mxu0 0.0
    %830 = vmatpush1.msra.mxu0 %v702
    %831 = vmatprep.subr.mxu0 0.0
    %832 = vmatpush1.msra.mxu0 %v701
    %833 = vmatprep.subr.mxu0 0.0
    %834 = vmatpush1.msra.mxu0 %v700
    %835 = vmatprep.subr.mxu0 0.0
    %836 = vmatpush1.msra.mxu0 %v699
    %837 = vmatprep.subr.mxu0 0.0
    %838 = vmatpush1.msra.mxu0 %v698
    %839 = vmatprep.subr.mxu0 0.0
    %840 = vmatpush1.msra.mxu0 %v697
    %841 = vmatprep.subr.mxu0 0.0
    %842 = vmatpush1.msra.mxu0 %v696
    %843 = vmatprep.subr.mxu0 0.0
    %844 = vmatpush1.msra.mxu0 %v695
    %845 = vmatprep.subr.mxu0 0.0
    %846 = vmatpush1.msra.mxu0 %v694
    %847 = vmatprep.subr.mxu0 0.0
    %848 = vmatpush1.msra.mxu0 %v693
    %849 = vmatprep.subr.mxu0 0.0
    %850 = vmatpush2.msra.mxu0 %v724
    %851 = vmatprep.subr.mxu0 0.0
    %852 = vmatpush2.msra.mxu0 %v723
    %853 = vmatprep.subr.mxu0 0.0
    %854 = vmatpush2.msra.mxu0 %v722
    %855 = vmatprep.subr.mxu0 0.0
    %856 = vmatpush2.msra.mxu0 %v721
    %857 = vmatprep.subr.mxu0 0.0
    %858 = vmatpush2.msra.mxu0 %v720
    %859 = vmatprep.subr.mxu0 0.0
    %860 = vmatpush2.msra.mxu0 %v719
    %861 = vmatprep.subr.mxu0 0.0
    %862 = vmatpush2.msra.mxu0 %v718
    %863 = vmatprep.subr.mxu0 0.0
    %864 = vmatpush2.msra.mxu0 %v717
    %865 = vmatprep.subr.mxu0 0.0
    %866 = vmatpush2.msra.mxu0 %v716
    %867 = vmatprep.subr.mxu0 0.0
    %868 = vmatpush2.msra.mxu0 %v715
    %869 = vmatprep.subr.mxu0 0.0
    %870 = vmatpush2.msra.mxu0 %v714
    %871 = vmatprep.subr.mxu0 0.0
    %872 = vmatpush2.msra.mxu0 %v713
    %873 = vmatprep.subr.mxu0 0.0
    %874 = vmatpush2.msra.mxu0 %v712
    %875 = vmatprep.subr.mxu0 0.0
    %876 = vmatpush2.msra.mxu0 %v711
    %877 = vmatprep.subr.mxu0 0.0
    %878 = vmatpush2.msra.mxu0 %v710
    %879 = vmatprep.subr.mxu0 0.0
    %880 = vmatpush2.msra.mxu0 %v709
    %881 = vmatprep.mubr.f32.mxu0 %v742
    %882 = vmatmul.mubr.f32.gmra.mxu0 %v738
    %v883 = vpop.f32.mrf.mxu0
    %v884 = vadd.f32 %v814, %v883
    %v885 = vpop.f32.mrf.mxu0
    %886 = vdwg.mxu0
    %vm887 = vcmask 57344
    %888 = vst.msk [vmem:[#allocation2] sm:$0x1] %vm887, %v884
    // Predicated region
    $region14: #{tpu_custom_call.1} parent=1 // pred_check
      _
    $region15: #{tpu_custom_call.1} parent=1 // pred_check_branch
      %890 = sbr.rel (0) target = $region17
    $region16: #{tpu_custom_call.1} parent=1 // pred_region
      %s892 = ssub.s32 16, 16
      %893 = vsyncadd [#allocation3], %s892
      %s895 = sshll.u32 [#allocation2], 4
      %s896 = int_to_ptr.vmem [resolvable:$true] %s895
      %898 = dma.vmem_to_hbm [thread:$0]  %s896, 16, %s3, [#allocation3]
    $region17: #{tpu_custom_call.1} parent=1 // pred_fallthru
      _
    // Predicated region
    $region18: #{tpu_custom_call.1} parent=1 // pred_check
      _
    $region19: #{tpu_custom_call.1} parent=1 // pred_check_branch
      %900 = sbr.rel (0) target = $region21
    $region20: #{tpu_custom_call.1} parent=1 // pred_region
      %901 = dma.done [#allocation3], 16
    $region21: #{tpu_custom_call.1} parent=1 // pred_fallthru
      _
    %902 = vsyncpa [#allocation3], 1

</llo_original>
